<compile_context>
chip_gen: v7x
topology: tpu7x:2x2x1
jax: 0.10.0
libtpu: 0.0.40
codegen_flags: <defaults>
</compile_context>

<pallas_src>
import functools

import jax
import jax.numpy as jnp
from jax.experimental import pallas as pl
from jax.experimental.pallas import tpu as pltpu

_MIB = 1024 * 1024


def _round_up(n: int, m: int) -> int:
    return ((n + m - 1) // m) * m


# --------------------------------------------------------------------------
# Kernel
# --------------------------------------------------------------------------
def _res_block_kernel(x_ref, gamma_ref, beta_ref, w1_ref, b1_ref, w2_ref,
                      b2_ref, out_ref, h_ref, acc_ref, *, eps):
    # Grid = (row_tiles, hidden_panels).
    # x_ref:   (tm, C) token tile          gamma/beta/b2: (1, C)
    # w1_ref:  (C, tn) column panel        b1_ref: (1, tn)
    # w2_ref:  (tn, C) row panel           out_ref: (tm, C)
    # h_ref / acc_ref: (tm, C) f32 VMEM scratch (persist across the j axis)
    j = pl.program_id(1)

    @pl.when(j == 0)
    def _():
        # --- LayerNorm (per-token, biased variance, all f32) ---
        x = x_ref[...].astype(jnp.float32)
        mean = jnp.mean(x, axis=-1, keepdims=True)
        xc = x - mean
        var = jnp.mean(xc * xc, axis=-1, keepdims=True)
        h = (xc * jax.lax.rsqrt(var + eps)
             * gamma_ref[...].astype(jnp.float32)
             + beta_ref[...].astype(jnp.float32))
        h_ref[...] = h
        # Residual (normalized h) and the final bias are folded in once.
        acc_ref[...] = h + b2_ref[...].astype(jnp.float32)

    h = h_ref[...]

    # --- Linear1 column panel (MXU, f32 accumulate) ---
    u = jnp.dot(h.astype(w1_ref.dtype), w1_ref[...],
                preferred_element_type=jnp.float32) \
        + b1_ref[...].astype(jnp.float32)                      # (tm, tn)

    # --- GELU (tanh approximation; see TODO at top) ---
    c0 = 0.7978845608028654  # sqrt(2/pi)
    u2 = u * u
    g = 0.5 * u * (1.0 + jnp.tanh(c0 * u * (1.0 + 0.044715 * u2)))

    # --- Linear2 partial contraction over this hidden panel ---
    acc_ref[...] += jnp.dot(g.astype(w2_ref.dtype), w2_ref[...],
                            preferred_element_type=jnp.float32)

    @pl.when(j == pl.num_programs(1) - 1)
    def _():
        out_ref[...] = acc_ref[...].astype(out_ref.dtype)


# --------------------------------------------------------------------------
# Tiling / VMEM heuristics
# --------------------------------------------------------------------------
def _estimate_vmem(tm, tn, C, xb, wb, pb, n_panels):
    nbuf_w = 1 if n_panels == 1 else 2
    return (2 * tm * C * xb                              # x tile (double buf)
            + 2 * tm * C * xb                            # out tile (double buf)
            + 3 * C * pb                                 # gamma, beta, b2
            + nbuf_w * (2 * C * tn * wb + tn * pb)       # W1/W2 panels + b1
            + 2 * tm * C * 4                             # h + acc scratch
            + 2 * tm * C * 4 + 2 * tm * tn * 4)          # compiler temporaries


def _choose_block_cols(C, wbytes, budget_bytes):
    """Full C (resident weights) if both C*C weights fit in half the budget,
    else the largest multiple of 128 dividing C whose double-buffered panels
    stay within half the budget."""
    if C % 128 != 0:
        return C                       # (8,128) rule: only full-width blocks
    if 2 * C * C * wbytes <= budget_bytes // 2:
        return C
    cap = max(128, (budget_bytes // 2) // (4 * C * wbytes))
    tn, t = 128, 128
    while t <= min(cap, C):
        if C % t == 0:
            tn = t
        t += 128
    return tn


def _make_spec(shape, index_map, single_buffer):
    """BlockSpec; request single buffering for constant-index blocks."""
    if single_buffer:
        try:
            return pl.BlockSpec(shape, index_map, pipeline_mode=pl.Buffered(1))
        except (TypeError, AttributeError):
            pass
    return pl.BlockSpec(shape, index_map)


# --------------------------------------------------------------------------
# Wrapper
# --------------------------------------------------------------------------
def simple_res_block(x, gamma, beta, w1_t, b1, w2_t, b2, *, eps=1e-5,
                     block_rows=256, block_cols=None,
                     vmem_budget_bytes=40 * _MIB,
                     single_buffer_constants=True):
    """SimpleResBlock forward.

    x:            (..., C)   activations (f32 or bf16)
    gamma, beta:  (C,)        LayerNorm affine params
    w1_t, w2_t:   (C, C)      linear weights PRE-TRANSPOSED to (in, out);
                              pre-cast to bfloat16 at load time for fast MXU
    b1, b2:       (C,)        linear biases
    """
    orig_shape = x.shape
    C = orig_shape[-1]
    x2 = x.reshape(-1, C)
    T = x2.shape[0]

    xb = jnp.dtype(x.dtype).itemsize
    wb = jnp.dtype(w1_t.dtype).itemsize
    pb = jnp.dtype(gamma.dtype).itemsize

    # Sublane packing: 8 rows for 32-bit, 16 for bf16, 32 for int8/fp8.
    pack = 32 // xb

    # Hidden-channel panel width (tn == C  ->  fully resident weights).
    tn = _choose_block_cols(C, wb, vmem_budget_bytes) if block_cols is None \
        else block_cols
    assert C % tn == 0 and (tn == C or tn % 128 == 0), (C, tn)
    n_panels = C // tn

    # Row tile: multiple of the sublane pack, shrunk if f32 intermediates
    # would blow the VMEM budget.
    tm = min(_round_up(block_rows, pack), _round_up(T, pack))
    while tm > pack and _estimate_vmem(tm, tn, C, xb, wb, pb,
                                       n_panels) > vmem_budget_bytes:
        tm = _round_up(max(tm // 2, pack), pack)

    Tp = _round_up(T, tm)
    if Tp != T:
        x2 = jnp.pad(x2, ((0, Tp - T), (0, 0)))

    gamma2, beta2 = gamma.reshape(1, C), beta.reshape(1, C)
    b1_2, b2_2 = b1.reshape(1, C), b2.reshape(1, C)

    grid = (Tp // tm, n_panels)
    kernel = functools.partial(_res_block_kernel, eps=eps)

    vmem_need = _estimate_vmem(tm, tn, C, xb, wb, pb, n_panels)
    vmem_limit = int(min(max(int(1.5 * vmem_need), 32 * _MIB),
                         max(64 * _MIB, int(vmem_budget_bytes))))

    cost = pl.CostEstimate(
        flops=4 * Tp * C * C,                  # two C x C matmuls per token
        transcendentals=Tp * C,                # one tanh per hidden unit
        bytes_accessed=int(2 * Tp * C * xb + 2 * C * C * wb + 4 * C * pb))

    def run(use_single_buffer):
        const = use_single_buffer                       # truly constant specs
        w_const = use_single_buffer and n_panels == 1   # weights constant only
        in_specs = [
            pl.BlockSpec((tm, C), lambda i, j: (i, 0)),          # x tile
            _make_spec((1, C), lambda i, j: (0, 0), const),      # gamma
            _make_spec((1, C), lambda i, j: (0, 0), const),      # beta
            _make_spec((C, tn), lambda i, j: (0, j), w_const),   # W1^T panel
            _make_spec((1, tn), lambda i, j: (0, j), w_const),   # b1 panel
            _make_spec((tn, C), lambda i, j: (j, 0), w_const),   # W2^T panel
            _make_spec((1, C), lambda i, j: (0, 0), const),      # b2
        ]
        return pl.pallas_call(
            kernel,
            out_shape=jax.ShapeDtypeStruct((Tp, C), x.dtype),
            grid_spec=pltpu.PrefetchScalarGridSpec(
                num_scalar_prefetch=0,
                grid=grid,
                in_specs=in_specs,
                out_specs=pl.BlockSpec((tm, C), lambda i, j: (i, 0)),
                scratch_shapes=[pltpu.VMEM((tm, C), jnp.float32),   # h
                                pltpu.VMEM((tm, C), jnp.float32)],  # acc
            ),
            compiler_params=pltpu.CompilerParams(
                dimension_semantics=("parallel", "arbitrary"),
                vmem_limit_bytes=vmem_limit),
            cost_estimate=cost,
        )(x2, gamma2, beta2, w1_t, b1_2, w2_t, b2_2)

    if single_buffer_constants:
        try:
            out2 = run(True)
        except Exception:       # fall back if Buffered(1)/pipeline_mode rejects
            out2 = run(False)
    else:
        out2 = run(False)

    return out2[:T].reshape(orig_shape)


# --------------------------------------------------------------------------
# Pure-JAX reference (mirrors the PyTorch forward; weights in (out, in))
# --------------------------------------------------------------------------
def reference(x, gamma, beta, w1_pt, b1, w2_pt, b2, eps=1e-5):
    mean = jnp.mean(x, axis=-1, keepdims=True)
    var = jnp.mean((x - mean) ** 2, axis=-1, keepdims=True)
    h = (x - mean) * jax.lax.rsqrt(var + eps) * gamma + beta
    u = h @ w1_pt.T + b1
    g = jax.nn.gelu(u, approximate=True)   # tanh form, matching the kernel
    v = g @ w2_pt.T + b2
    return h + v


if __name__ == "__main__":
    root = jax.random.PRNGKey(0)
    key_a, key_b = jax.random.split(root)

    # ---- Test 1: small f32 case, resident-weight single-panel path --------
    B, S, C = 2, 8, 128
    ks = jax.random.split(key_a, 7)
    x = jax.random.normal(ks[0], (B, S, C), dtype=jnp.float32)
    gamma = 1.0 + 0.1 * jax.random.normal(ks[1], (C,), dtype=jnp.float32)
    beta = 0.1 * jax.random.normal(ks[2], (C,), dtype=jnp.float32)
    w1_pt = 0.05 * jax.random.normal(ks[3], (C, C), dtype=jnp.float32)  # (out,in)
    b1 = 0.05 * jax.random.normal(ks[4], (C,), dtype=jnp.float32)
    w2_pt = 0.05 * jax.random.normal(ks[5], (C, C), dtype=jnp.float32)  # (out,in)
    b2 = 0.05 * jax.random.normal(ks[6], (C,), dtype=jnp.float32)

    # Transpose ONCE at parameter-load time (not per call).
    w1_t, w2_t = jnp.asarray(w1_pt.T), jnp.asarray(w2_pt.T)

    out = jax.block_until_ready(
        simple_res_block(x, gamma, beta, w1_t, b1, w2_t, b2))
    ref = reference(x, gamma, beta, w1_pt, b1, w2_pt, b2)
    assert out.shape == (B, S, C)
    err = float(jnp.max(jnp.abs(out - ref)))
    assert jnp.allclose(out, ref, atol=2e-4, rtol=2e-4), f"f32 max err {err}"

    # ---- Test 2: bf16 weights (native MXU path) + streamed weight panels
    #      + multiple row tiles (the large-C / v7x configuration) -----------
    B2, S2, C2 = 2, 24, 256
    ks = jax.random.split(key_b, 7)
    x_b = jax.random.normal(ks[0], (B2, S2, C2), dtype=jnp.float32)
    gamma_b = 1.0 + 0.1 * jax.random.normal(ks[1], (C2,), dtype=jnp.float32)
    beta_b = 0.1 * jax.random.normal(ks[2], (C2,), dtype=jnp.float32)
    w1_pt_b = 0.05 * jax.random.normal(ks[3], (C2, C2), dtype=jnp.float32)
    b1_b = 0.05 * jax.random.normal(ks[4], (C2,), dtype=jnp.float32)
    w2_pt_b = 0.05 * jax.random.normal(ks[5], (C2, C2), dtype=jnp.float32)
    b2_b = 0.05 * jax.random.normal(ks[6], (C2,), dtype=jnp.float32)

    # Pre-transpose AND pre-cast to bf16 once at parameter-load time
    # (LN params / biases stay f32 for accuracy).
    w1_bf = jnp.asarray(w1_pt_b.T, dtype=jnp.bfloat16)
    w2_bf = jnp.asarray(w2_pt_b.T, dtype=jnp.bfloat16)

    out_b = jax.block_until_ready(
        simple_res_block(x_b, gamma_b, beta_b, w1_bf, b1_b, w2_bf, b2_b,
                         block_rows=16, block_cols=128))  # 3 row tiles, 2 panels
    ref_b = reference(x_b, gamma_b, beta_b,
                      w1_bf.astype(jnp.float32).T, b1_b,
                      w2_bf.astype(jnp.float32).T, b2_b)
    assert out_b.shape == (B2, S2, C2)
    err_b = float(jnp.max(jnp.abs(out_b - ref_b)))
    assert jnp.allclose(out_b, ref_b, atol=2e-2, rtol=2e-2), \
        f"bf16/streamed max err {err_b}"

    print("KERNEL_OK")
</pallas_src>

<mosaic_0001>
module attributes {stable_mosaic.version = 11 : i64} {
  func.func @_res_block_kernel(%arg0: i32, %arg1: i32, %arg2: memref<16x128xf32, #tpu.memory_space<vmem>>, %arg3: memref<1x128xf32, #tpu.memory_space<vmem>>, %arg4: memref<1x128xf32, #tpu.memory_space<vmem>>, %arg5: memref<128x128xf32, #tpu.memory_space<vmem>>, %arg6: memref<1x128xf32, #tpu.memory_space<vmem>>, %arg7: memref<128x128xf32, #tpu.memory_space<vmem>>, %arg8: memref<1x128xf32, #tpu.memory_space<vmem>>, %arg9: memref<16x128xf32, #tpu.memory_space<vmem>>, %arg10: memref<16x128xf32, #tpu.memory_space<vmem>>, %arg11: memref<16x128xf32, #tpu.memory_space<vmem>>) attributes {dimension_semantics = [#tpu.dimension_semantics<parallel>, #tpu.dimension_semantics<arbitrary>], iteration_bounds = array<i64: 1, 1>, scalar_prefetch = 0 : i64, scratch_operands = 2 : i64, tpu.core_type = #tpu.core_type<tc>, window_params = [{transform_indices = @transform_0, window_bounds = array<i64: 16, 128>}, {pipeline_mode = #tpu.pipeline_mode<synchronous>, transform_indices = @transform_1, window_bounds = array<i64: 1, 128>}, {pipeline_mode = #tpu.pipeline_mode<synchronous>, transform_indices = @transform_2, window_bounds = array<i64: 1, 128>}, {pipeline_mode = #tpu.pipeline_mode<synchronous>, transform_indices = @transform_3, window_bounds = array<i64: 128, 128>}, {pipeline_mode = #tpu.pipeline_mode<synchronous>, transform_indices = @transform_4, window_bounds = array<i64: 1, 128>}, {pipeline_mode = #tpu.pipeline_mode<synchronous>, transform_indices = @transform_5, window_bounds = array<i64: 128, 128>}, {pipeline_mode = #tpu.pipeline_mode<synchronous>, transform_indices = @transform_6, window_bounds = array<i64: 1, 128>}, {transform_indices = @transform_7, window_bounds = array<i64: 16, 128>}]} {
    %c0_i32 = arith.constant 0 : i32
    %0 = arith.cmpi eq, %arg1, %c0_i32 : i32
    %1 = arith.extui %0 : i1 to i32
    %c0_i32_0 = arith.constant 0 : i32
    %2 = arith.cmpi ne, %1, %c0_i32_0 : i32
    scf.if %2 {
      %c0_20 = arith.constant 0 : index
      %c0_21 = arith.constant 0 : index
      %31 = vector.load %arg2[%c0_20, %c0_21] : memref<16x128xf32, #tpu.memory_space<vmem>>, vector<16x128xf32>
      %cst_22 = arith.constant dense<0.000000e+00> : vector<16xf32>
      %32 = vector.multi_reduction <add>, %31, %cst_22 [1] : vector<16x128xf32> to vector<16xf32>
      %33 = vector.shape_cast %32 : vector<16xf32> to vector<16x1xf32>
      %cst_23 = arith.constant 1.280000e+02 : f32
      %34 = vector.broadcast %cst_23 : f32 to vector<16x1xf32>
      %35 = arith.divf %33, %34 : vector<16x1xf32>
      %36 = vector.broadcast %35 : vector<16x1xf32> to vector<16x128xf32>
      %37 = arith.subf %31, %36 : vector<16x128xf32>
      %38 = arith.mulf %37, %37 : vector<16x128xf32>
      %cst_24 = arith.constant dense<0.000000e+00> : vector<16xf32>
      %39 = vector.multi_reduction <add>, %38, %cst_24 [1] : vector<16x128xf32> to vector<16xf32>
      %40 = vector.shape_cast %39 : vector<16xf32> to vector<16x1xf32>
      %cst_25 = arith.constant 1.280000e+02 : f32
      %41 = vector.broadcast %cst_25 : f32 to vector<16x1xf32>
      %42 = arith.divf %40, %41 : vector<16x1xf32>
      %cst_26 = arith.constant 9.99999974E-6 : f32
      %43 = vector.broadcast %cst_26 : f32 to vector<16x1xf32>
      %44 = arith.addf %42, %43 : vector<16x1xf32>
      %45 = math.rsqrt %44 : vector<16x1xf32>
      %46 = vector.broadcast %45 : vector<16x1xf32> to vector<16x128xf32>
      %47 = arith.mulf %37, %46 : vector<16x128xf32>
      %c0_27 = arith.constant 0 : index
      %c0_28 = arith.constant 0 : index
      %48 = vector.load %arg3[%c0_27, %c0_28] : memref<1x128xf32, #tpu.memory_space<vmem>>, vector<1x128xf32>
      %49 = vector.broadcast %48 : vector<1x128xf32> to vector<16x128xf32>
      %50 = arith.mulf %47, %49 : vector<16x128xf32>
      %c0_29 = arith.constant 0 : index
      %c0_30 = arith.constant 0 : index
      %51 = vector.load %arg4[%c0_29, %c0_30] : memref<1x128xf32, #tpu.memory_space<vmem>>, vector<1x128xf32>
      %52 = vector.broadcast %51 : vector<1x128xf32> to vector<16x128xf32>
      %53 = arith.addf %50, %52 : vector<16x128xf32>
      %c0_31 = arith.constant 0 : index
      %c0_32 = arith.constant 0 : index
      %54 = vector.load %arg10[%c0_31, %c0_32] : memref<16x128xf32, #tpu.memory_space<vmem>>, vector<16x128xf32>
      tpu.vector_store %arg10[%c0_31, %c0_32], %53 {strides = array<i32>} : memref<16x128xf32, #tpu.memory_space<vmem>>, vector<16x128xf32>,
      %c0_33 = arith.constant 0 : index
      %c0_34 = arith.constant 0 : index
      %55 = vector.load %arg8[%c0_33, %c0_34] : memref<1x128xf32, #tpu.memory_space<vmem>>, vector<1x128xf32>
      %56 = vector.broadcast %55 : vector<1x128xf32> to vector<16x128xf32>
      %57 = arith.addf %53, %56 : vector<16x128xf32>
      %c0_35 = arith.constant 0 : index
      %c0_36 = arith.constant 0 : index
      %58 = vector.load %arg11[%c0_35, %c0_36] : memref<16x128xf32, #tpu.memory_space<vmem>>, vector<16x128xf32>
      tpu.vector_store %arg11[%c0_35, %c0_36], %57 {strides = array<i32>} : memref<16x128xf32, #tpu.memory_space<vmem>>, vector<16x128xf32>,
    } else {
    }
    %c0 = arith.constant 0 : index
    %c0_1 = arith.constant 0 : index
    %3 = vector.load %arg10[%c0, %c0_1] : memref<16x128xf32, #tpu.memory_space<vmem>>, vector<16x128xf32>
    %c0_2 = arith.constant 0 : index
    %c0_3 = arith.constant 0 : index
    %4 = vector.load %arg5[%c0_2, %c0_3] : memref<128x128xf32, #tpu.memory_space<vmem>>, vector<128x128xf32>
    %cst = arith.constant dense<0.000000e+00> : vector<16x128xf32>
    %5 = tpu.matmul %3, %4, %cst {dimension_numbers = #tpu.dot_dimension_numbers<[1], [0], [0], [1], [0, 0, 1, 1], [], []>} : vector<16x128xf32>, vector<128x128xf32>, vector<16x128xf32> -> vector<16x128xf32>
    %c0_4 = arith.constant 0 : index
    %c0_5 = arith.constant 0 : index
    %6 = vector.load %arg6[%c0_4, %c0_5] : memref<1x128xf32, #tpu.memory_space<vmem>>, vector<1x128xf32>
    %7 = vector.broadcast %6 : vector<1x128xf32> to vector<16x128xf32>
    %8 = arith.addf %5, %7 : vector<16x128xf32>
    %9 = arith.mulf %8, %8 : vector<16x128xf32>
    %cst_6 = arith.constant 5.000000e-01 : f32
    %10 = vector.broadcast %cst_6 : f32 to vector<16x128xf32>
    %11 = arith.mulf %10, %8 : vector<16x128xf32>
    %cst_7 = arith.constant 0.797884583 : f32
    %12 = vector.broadcast %cst_7 : f32 to vector<16x128xf32>
    %13 = arith.mulf %12, %8 : vector<16x128xf32>
    %cst_8 = arith.constant 4.471500e-02 : f32
    %14 = vector.broadcast %cst_8 : f32 to vector<16x128xf32>
    %15 = arith.mulf %14, %9 : vector<16x128xf32>
    %cst_9 = arith.constant 1.000000e+00 : f32
    %16 = vector.broadcast %cst_9 : f32 to vector<16x128xf32>
    %17 = arith.addf %16, %15 : vector<16x128xf32>
    %18 = arith.mulf %13, %17 : vector<16x128xf32>
    %19 = math.tanh %18 : vector<16x128xf32>
    %cst_10 = arith.constant 1.000000e+00 : f32
    %20 = vector.broadcast %cst_10 : f32 to vector<16x128xf32>
    %21 = arith.addf %20, %19 : vector<16x128xf32>
    %22 = arith.mulf %11, %21 : vector<16x128xf32>
    %c0_11 = arith.constant 0 : index
    %c0_12 = arith.constant 0 : index
    %23 = vector.load %arg11[%c0_11, %c0_12] : memref<16x128xf32, #tpu.memory_space<vmem>>, vector<16x128xf32>
    %c0_13 = arith.constant 0 : index
    %c0_14 = arith.constant 0 : index
    %24 = vector.load %arg7[%c0_13, %c0_14] : memref<128x128xf32, #tpu.memory_space<vmem>>, vector<128x128xf32>
    %cst_15 = arith.constant dense<0.000000e+00> : vector<16x128xf32>
    %25 = tpu.matmul %22, %24, %cst_15 {dimension_numbers = #tpu.dot_dimension_numbers<[1], [0], [0], [1], [0, 0, 1, 1], [], []>} : vector<16x128xf32>, vector<128x128xf32>, vector<16x128xf32> -> vector<16x128xf32>
    %26 = arith.addf %23, %25 : vector<16x128xf32>
    %c0_16 = arith.constant 0 : index
    %c0_17 = arith.constant 0 : index
    %27 = vector.load %arg11[%c0_16, %c0_17] : memref<16x128xf32, #tpu.memory_space<vmem>>, vector<16x128xf32>
    tpu.vector_store %arg11[%c0_16, %c0_17], %26 {strides = array<i32>} : memref<16x128xf32, #tpu.memory_space<vmem>>, vector<16x128xf32>,
    %c0_i32_18 = arith.constant 0 : i32
    %28 = arith.cmpi eq, %arg1, %c0_i32_18 : i32
    %29 = arith.extui %28 : i1 to i32
    %c0_i32_19 = arith.constant 0 : i32
    %30 = arith.cmpi ne, %29, %c0_i32_19 : i32
    scf.if %30 {
      %c0_20 = arith.constant 0 : index
      %c0_21 = arith.constant 0 : index
      %31 = vector.load %arg11[%c0_20, %c0_21] : memref<16x128xf32, #tpu.memory_space<vmem>>, vector<16x128xf32>
      %c0_22 = arith.constant 0 : index
      %c0_23 = arith.constant 0 : index
      %32 = vector.load %arg9[%c0_22, %c0_23] : memref<16x128xf32, #tpu.memory_space<vmem>>, vector<16x128xf32>
      tpu.vector_store %arg9[%c0_22, %c0_23], %31 {strides = array<i32>} : memref<16x128xf32, #tpu.memory_space<vmem>>, vector<16x128xf32>,
    } else {
    }
    return
  }
  func.func @transform_0(%arg0: i32, %arg1: i32) -> (i32, i32) {
    %c0_i32 = arith.constant 0 : i32
    %c0_i32_0 = arith.constant 0 : i32
    return %arg0, %c0_i32 : i32, i32
  }
  func.func @transform_1(%arg0: i32, %arg1: i32) -> (i32, i32) {
    %c0_i32 = arith.constant 0 : i32
    %c0_i32_0 = arith.constant 0 : i32
    %c0_i32_1 = arith.constant 0 : i32
    return %c0_i32, %c0_i32_0 : i32, i32
  }
  func.func @transform_2(%arg0: i32, %arg1: i32) -> (i32, i32) {
    %c0_i32 = arith.constant 0 : i32
    %c0_i32_0 = arith.constant 0 : i32
    %c0_i32_1 = arith.constant 0 : i32
    return %c0_i32, %c0_i32_0 : i32, i32
  }
  func.func @transform_3(%arg0: i32, %arg1: i32) -> (i32, i32) {
    %c0_i32 = arith.constant 0 : i32
    %c0_i32_0 = arith.constant 0 : i32
    return %c0_i32, %arg1 : i32, i32
  }
  func.func @transform_4(%arg0: i32, %arg1: i32) -> (i32, i32) {
    %c0_i32 = arith.constant 0 : i32
    %c0_i32_0 = arith.constant 0 : i32
    return %c0_i32, %arg1 : i32, i32
  }
  func.func @transform_5(%arg0: i32, %arg1: i32) -> (i32, i32) {
    %c0_i32 = arith.constant 0 : i32
    %c0_i32_0 = arith.constant 0 : i32
    return %arg1, %c0_i32 : i32, i32
  }
  func.func @transform_6(%arg0: i32, %arg1: i32) -> (i32, i32) {
    %c0_i32 = arith.constant 0 : i32
    %c0_i32_0 = arith.constant 0 : i32
    %c0_i32_1 = arith.constant 0 : i32
    return %c0_i32, %c0_i32_0 : i32, i32
  }
  func.func @transform_7(%arg0: i32, %arg1: i32) -> (i32, i32) {
    %c0_i32 = arith.constant 0 : i32
    %c0_i32_0 = arith.constant 0 : i32
    return %arg0, %c0_i32 : i32, i32
  }
}

module attributes {stable_mosaic.version = 11 : i64} {
  func.func @_res_block_kernel(%arg0: i32, %arg1: i32, %arg2: memref<16x128xf32, #tpu.memory_space<vmem>>, %arg3: memref<1x128xf32, #tpu.memory_space<vmem>>, %arg4: memref<1x128xf32, #tpu.memory_space<vmem>>, %arg5: memref<128x128xf32, #tpu.memory_space<vmem>>, %arg6: memref<1x128xf32, #tpu.memory_space<vmem>>, %arg7: memref<128x128xf32, #tpu.memory_space<vmem>>, %arg8: memref<1x128xf32, #tpu.memory_space<vmem>>, %arg9: memref<16x128xf32, #tpu.memory_space<vmem>>, %arg10: memref<16x128xf32, #tpu.memory_space<vmem>>, %arg11: memref<16x128xf32, #tpu.memory_space<vmem>>) attributes {dimension_semantics = [#tpu.dimension_semantics<parallel>, #tpu.dimension_semantics<arbitrary>], iteration_bounds = array<i64: 1, 1>, scalar_prefetch = 0 : i64, scratch_operands = 2 : i64, tpu.core_type = #tpu.core_type<tc>, window_params = [{transform_indices = @transform_0, window_bounds = array<i64: 16, 128>}, {pipeline_mode = #tpu.pipeline_mode<synchronous>, transform_indices = @transform_1, window_bounds = array<i64: 1, 128>}, {pipeline_mode = #tpu.pipeline_mode<synchronous>, transform_indices = @transform_2, window_bounds = array<i64: 1, 128>}, {transform_indices = @transform_3, window_bounds = array<i64: 128, 128>}, {transform_indices = @transform_4, window_bounds = array<i64: 1, 128>}, {transform_indices = @transform_5, window_bounds = array<i64: 128, 128>}, {pipeline_mode = #tpu.pipeline_mode<synchronous>, transform_indices = @transform_6, window_bounds = array<i64: 1, 128>}, {transform_indices = @transform_7, window_bounds = array<i64: 16, 128>}]} {
    %c0_i32 = arith.constant 0 : i32
    %0 = arith.cmpi eq, %arg1, %c0_i32 : i32
    %1 = arith.extui %0 : i1 to i32
    %c0_i32_0 = arith.constant 0 : i32
    %2 = arith.cmpi ne, %1, %c0_i32_0 : i32
    scf.if %2 {
      %c0_20 = arith.constant 0 : index
      %c0_21 = arith.constant 0 : index
      %31 = vector.load %arg2[%c0_20, %c0_21] : memref<16x128xf32, #tpu.memory_space<vmem>>, vector<16x128xf32>
      %cst_22 = arith.constant dense<0.000000e+00> : vector<16xf32>
      %32 = vector.multi_reduction <add>, %31, %cst_22 [1] : vector<16x128xf32> to vector<16xf32>
      %33 = vector.shape_cast %32 : vector<16xf32> to vector<16x1xf32>
      %cst_23 = arith.constant 1.280000e+02 : f32
      %34 = vector.broadcast %cst_23 : f32 to vector<16x1xf32>
      %35 = arith.divf %33, %34 : vector<16x1xf32>
      %36 = vector.broadcast %35 : vector<16x1xf32> to vector<16x128xf32>
      %37 = arith.subf %31, %36 : vector<16x128xf32>
      %38 = arith.mulf %37, %37 : vector<16x128xf32>
      %cst_24 = arith.constant dense<0.000000e+00> : vector<16xf32>
      %39 = vector.multi_reduction <add>, %38, %cst_24 [1] : vector<16x128xf32> to vector<16xf32>
      %40 = vector.shape_cast %39 : vector<16xf32> to vector<16x1xf32>
      %cst_25 = arith.constant 1.280000e+02 : f32
      %41 = vector.broadcast %cst_25 : f32 to vector<16x1xf32>
      %42 = arith.divf %40, %41 : vector<16x1xf32>
      %cst_26 = arith.constant 9.99999974E-6 : f32
      %43 = vector.broadcast %cst_26 : f32 to vector<16x1xf32>
      %44 = arith.addf %42, %43 : vector<16x1xf32>
      %45 = math.rsqrt %44 : vector<16x1xf32>
      %46 = vector.broadcast %45 : vector<16x1xf32> to vector<16x128xf32>
      %47 = arith.mulf %37, %46 : vector<16x128xf32>
      %c0_27 = arith.constant 0 : index
      %c0_28 = arith.constant 0 : index
      %48 = vector.load %arg3[%c0_27, %c0_28] : memref<1x128xf32, #tpu.memory_space<vmem>>, vector<1x128xf32>
      %49 = vector.broadcast %48 : vector<1x128xf32> to vector<16x128xf32>
      %50 = arith.mulf %47, %49 : vector<16x128xf32>
      %c0_29 = arith.constant 0 : index
      %c0_30 = arith.constant 0 : index
      %51 = vector.load %arg4[%c0_29, %c0_30] : memref<1x128xf32, #tpu.memory_space<vmem>>, vector<1x128xf32>
      %52 = vector.broadcast %51 : vector<1x128xf32> to vector<16x128xf32>
      %53 = arith.addf %50, %52 : vector<16x128xf32>
      %c0_31 = arith.constant 0 : index
      %c0_32 = arith.constant 0 : index
      %54 = vector.load %arg10[%c0_31, %c0_32] : memref<16x128xf32, #tpu.memory_space<vmem>>, vector<16x128xf32>
      tpu.vector_store %arg10[%c0_31, %c0_32], %53 {strides = array<i32>} : memref<16x128xf32, #tpu.memory_space<vmem>>, vector<16x128xf32>,
      %c0_33 = arith.constant 0 : index
      %c0_34 = arith.constant 0 : index
      %55 = vector.load %arg8[%c0_33, %c0_34] : memref<1x128xf32, #tpu.memory_space<vmem>>, vector<1x128xf32>
      %56 = vector.broadcast %55 : vector<1x128xf32> to vector<16x128xf32>
      %57 = arith.addf %53, %56 : vector<16x128xf32>
      %c0_35 = arith.constant 0 : index
      %c0_36 = arith.constant 0 : index
      %58 = vector.load %arg11[%c0_35, %c0_36] : memref<16x128xf32, #tpu.memory_space<vmem>>, vector<16x128xf32>
      tpu.vector_store %arg11[%c0_35, %c0_36], %57 {strides = array<i32>} : memref<16x128xf32, #tpu.memory_space<vmem>>, vector<16x128xf32>,
    } else {
    }
    %c0 = arith.constant 0 : index
    %c0_1 = arith.constant 0 : index
    %3 = vector.load %arg10[%c0, %c0_1] : memref<16x128xf32, #tpu.memory_space<vmem>>, vector<16x128xf32>
    %c0_2 = arith.constant 0 : index
    %c0_3 = arith.constant 0 : index
    %4 = vector.load %arg5[%c0_2, %c0_3] : memref<128x128xf32, #tpu.memory_space<vmem>>, vector<128x128xf32>
    %cst = arith.constant dense<0.000000e+00> : vector<16x128xf32>
    %5 = tpu.matmul %3, %4, %cst {dimension_numbers = #tpu.dot_dimension_numbers<[1], [0], [0], [1], [0, 0, 1, 1], [], []>} : vector<16x128xf32>, vector<128x128xf32>, vector<16x128xf32> -> vector<16x128xf32>
    %c0_4 = arith.constant 0 : index
    %c0_5 = arith.constant 0 : index
    %6 = vector.load %arg6[%c0_4, %c0_5] : memref<1x128xf32, #tpu.memory_space<vmem>>, vector<1x128xf32>
    %7 = vector.broadcast %6 : vector<1x128xf32> to vector<16x128xf32>
    %8 = arith.addf %5, %7 : vector<16x128xf32>
    %9 = arith.mulf %8, %8 : vector<16x128xf32>
    %cst_6 = arith.constant 5.000000e-01 : f32
    %10 = vector.broadcast %cst_6 : f32 to vector<16x128xf32>
    %11 = arith.mulf %10, %8 : vector<16x128xf32>
    %cst_7 = arith.constant 0.797884583 : f32
    %12 = vector.broadcast %cst_7 : f32 to vector<16x128xf32>
    %13 = arith.mulf %12, %8 : vector<16x128xf32>
    %cst_8 = arith.constant 4.471500e-02 : f32
    %14 = vector.broadcast %cst_8 : f32 to vector<16x128xf32>
    %15 = arith.mulf %14, %9 : vector<16x128xf32>
    %cst_9 = arith.constant 1.000000e+00 : f32
    %16 = vector.broadcast %cst_9 : f32 to vector<16x128xf32>
    %17 = arith.addf %16, %15 : vector<16x128xf32>
    %18 = arith.mulf %13, %17 : vector<16x128xf32>
    %19 = math.tanh %18 : vector<16x128xf32>
    %cst_10 = arith.constant 1.000000e+00 : f32
    %20 = vector.broadcast %cst_10 : f32 to vector<16x128xf32>
    %21 = arith.addf %20, %19 : vector<16x128xf32>
    %22 = arith.mulf %11, %21 : vector<16x128xf32>
    %c0_11 = arith.constant 0 : index
    %c0_12 = arith.constant 0 : index
    %23 = vector.load %arg11[%c0_11, %c0_12] : memref<16x128xf32, #tpu.memory_space<vmem>>, vector<16x128xf32>
    %c0_13 = arith.constant 0 : index
    %c0_14 = arith.constant 0 : index
    %24 = vector.load %arg7[%c0_13, %c0_14] : memref<128x128xf32, #tpu.memory_space<vmem>>, vector<128x128xf32>
    %cst_15 = arith.constant dense<0.000000e+00> : vector<16x128xf32>
    %25 = tpu.matmul %22, %24, %cst_15 {dimension_numbers = #tpu.dot_dimension_numbers<[1], [0], [0], [1], [0, 0, 1, 1], [], []>} : vector<16x128xf32>, vector<128x128xf32>, vector<16x128xf32> -> vector<16x128xf32>
    %26 = arith.addf %23, %25 : vector<16x128xf32>
    %c0_16 = arith.constant 0 : index
    %c0_17 = arith.constant 0 : index
    %27 = vector.load %arg11[%c0_16, %c0_17] : memref<16x128xf32, #tpu.memory_space<vmem>>, vector<16x128xf32>
    tpu.vector_store %arg11[%c0_16, %c0_17], %26 {strides = array<i32>} : memref<16x128xf32, #tpu.memory_space<vmem>>, vector<16x128xf32>,
    %c0_i32_18 = arith.constant 0 : i32
    %28 = arith.cmpi eq, %arg1, %c0_i32_18 : i32
    %29 = arith.extui %28 : i1 to i32
    %c0_i32_19 = arith.constant 0 : i32
    %30 = arith.cmpi ne, %29, %c0_i32_19 : i32
    scf.if %30 {
      %c0_20 = arith.constant 0 : index
      %c0_21 = arith.constant 0 : index
      %31 = vector.load %arg11[%c0_20, %c0_21] : memref<16x128xf32, #tpu.memory_space<vmem>>, vector<16x128xf32>
      %c0_22 = arith.constant 0 : index
      %c0_23 = arith.constant 0 : index
      %32 = vector.load %arg9[%c0_22, %c0_23] : memref<16x128xf32, #tpu.memory_space<vmem>>, vector<16x128xf32>
      tpu.vector_store %arg9[%c0_22, %c0_23], %31 {strides = array<i32>} : memref<16x128xf32, #tpu.memory_space<vmem>>, vector<16x128xf32>,
    } else {
    }
    return
  }
  func.func @transform_0(%arg0: i32, %arg1: i32) -> (i32, i32) {
    %c0_i32 = arith.constant 0 : i32
    %c0_i32_0 = arith.constant 0 : i32
    return %arg0, %c0_i32 : i32, i32
  }
  func.func @transform_1(%arg0: i32, %arg1: i32) -> (i32, i32) {
    %c0_i32 = arith.constant 0 : i32
    %c0_i32_0 = arith.constant 0 : i32
    %c0_i32_1 = arith.constant 0 : i32
    return %c0_i32, %c0_i32_0 : i32, i32
  }
  func.func @transform_2(%arg0: i32, %arg1: i32) -> (i32, i32) {
    %c0_i32 = arith.constant 0 : i32
    %c0_i32_0 = arith.constant 0 : i32
    %c0_i32_1 = arith.constant 0 : i32
    return %c0_i32, %c0_i32_0 : i32, i32
  }
  func.func @transform_3(%arg0: i32, %arg1: i32) -> (i32, i32) {
    %c0_i32 = arith.constant 0 : i32
    %c0_i32_0 = arith.constant 0 : i32
    return %c0_i32, %arg1 : i32, i32
  }
  func.func @transform_4(%arg0: i32, %arg1: i32) -> (i32, i32) {
    %c0_i32 = arith.constant 0 : i32
    %c0_i32_0 = arith.constant 0 : i32
    return %c0_i32, %arg1 : i32, i32
  }
  func.func @transform_5(%arg0: i32, %arg1: i32) -> (i32, i32) {
    %c0_i32 = arith.constant 0 : i32
    %c0_i32_0 = arith.constant 0 : i32
    return %arg1, %c0_i32 : i32, i32
  }
  func.func @transform_6(%arg0: i32, %arg1: i32) -> (i32, i32) {
    %c0_i32 = arith.constant 0 : i32
    %c0_i32_0 = arith.constant 0 : i32
    %c0_i32_1 = arith.constant 0 : i32
    return %c0_i32, %c0_i32_0 : i32, i32
  }
  func.func @transform_7(%arg0: i32, %arg1: i32) -> (i32, i32) {
    %c0_i32 = arith.constant 0 : i32
    %c0_i32_0 = arith.constant 0 : i32
    return %arg0, %c0_i32 : i32, i32
  }
}

</mosaic_0001>

<llo_original>
// kernel: tpu_custom_call.1
$region0: #{tpu_custom_call.1}
  #allocation0 [shape = 'u32[]', space=smem, size = 0x4, offset = 0x4, fixed_abs, tag = 'smem constant byte address 0x4 - core index']
  #allocation1 [shape = 'u32[144,128]{1,0:T(1,128)}', space=vmem, size = 0x12000, scoped, tag = 'internal scratch']
  #allocation2 [shape = 'f32[16,128]{1,0:T(8,128)}', space=vmem, size = 0x2000, scoped, tag = 'scratch operand']
  #allocation3 [shape = 'f32[16,128]{1,0:T(8,128)}', space=vmem, size = 0x2000, scoped, tag = 'scratch operand']
  %s0 = inlined_call_operand.hbm [shape: f32[16,128], index: 0, kind: input, shape index: {}]
  %s1 = inlined_call_operand.vmem [shape: f32[1,128], index: 1, kind: input, shape index: {}]
  %s2 = inlined_call_operand.vmem [shape: f32[1,128], index: 2, kind: input, shape index: {}]
  %s3 = inlined_call_operand.hbm [shape: f32[128,128], index: 3, kind: input, shape index: {}]
  %s4 = inlined_call_operand.vmem [shape: f32[1,128], index: 4, kind: input, shape index: {}]
  %s5 = inlined_call_operand.hbm [shape: f32[128,128], index: 5, kind: input, shape index: {}]
  %s6 = inlined_call_operand.vmem [shape: f32[1,128], index: 6, kind: input, shape index: {}]
  %s7 = inlined_call_operand.hbm [shape: f32[16,128], index: 7, kind: output, shape index: {}]
  %s8 = sld [smem:[#allocation0]]
  $region58: #{tpu_custom_call.1} parent=0
    _
  %s10 = ssub.s32 1, %s8
  %s11 = scalar_select 0, %s10, %s8
  $region1: #{tpu_custom_call.1} parent=0
    #allocation4 [shape = 'u8[8192]{0}', space=vmem, size = 0x2000, scoped, tag = 'input window, operand 0, single buffered']
    #allocation5 [shape = 's32[1]{0}', space=sflag, size = 0x4, scoped, tag = 'scoped memory for tpu_custom_call.1']
    #allocation6 [shape = 's32[1]{0}', space=sflag, size = 0x4, scoped, tag = 'scoped memory for tpu_custom_call.1']
    #allocation7 [shape = 'u8[65536]{0}', space=vmem, size = 0x10000, scoped, tag = 'input window, operand 3, single buffered']
    #allocation8 [shape = 's32[1]{0}', space=sflag, size = 0x4, scoped, tag = 'scoped memory for tpu_custom_call.1']
    #allocation9 [shape = 'u8[65536]{0}', space=vmem, size = 0x10000, scoped, tag = 'input window, operand 5, single buffered']
    #allocation10 [shape = 'u8[8192]{0}', space=vmem, size = 0x2000, scoped, tag = 'output window, operand 0, single buffered']
    %12 = vsyncpa [#allocation5], 0
    %13 = vsyncpa [#allocation8], 0
    %14 = vsyncpa [#allocation6], 0
    // Predicated region
    $region2: #{tpu_custom_call.1} parent=1 // pred_check
      _
    $region3: #{tpu_custom_call.1} parent=1 // pred_check_branch
      %16 = sbr.rel (0) target = $region5
    $region4: #{tpu_custom_call.1} parent=1 // pred_region
      %s18 = ssub.s32 256, 256
      %19 = vsyncadd [#allocation5], %s18
      %s20 = sshll.u32 [#allocation4], 4
      %s21 = int_to_ptr.vmem [resolvable:$true] %s20
      %26 = dma.hbm_to_vmem [thread:$0]  %s0, 256, %s21, [#allocation5], 128, 128, 8
    $region5: #{tpu_custom_call.1} parent=1 // pred_fallthru
      _
    // Predicated region
    $region6: #{tpu_custom_call.1} parent=1 // pred_check
      _
    $region7: #{tpu_custom_call.1} parent=1 // pred_check_branch
      %28 = sbr.rel (0) target = $region9
    $region8: #{tpu_custom_call.1} parent=1 // pred_region
      _
    $region9: #{tpu_custom_call.1} parent=1 // pred_fallthru
      _
    // Predicated region
    $region10: #{tpu_custom_call.1} parent=1 // pred_check
      _
    $region11: #{tpu_custom_call.1} parent=1 // pred_check_branch
      %30 = sbr.rel (0) target = $region13
    $region12: #{tpu_custom_call.1} parent=1 // pred_region
      _
    $region13: #{tpu_custom_call.1} parent=1 // pred_fallthru
      _
    // Predicated region
    $region14: #{tpu_custom_call.1} parent=1 // pred_check
      _
    $region15: #{tpu_custom_call.1} parent=1 // pred_check_branch
      %32 = sbr.rel (0) target = $region17
    $region16: #{tpu_custom_call.1} parent=1 // pred_region
      %s34 = ssub.s32 2048, 2048
      %35 = vsyncadd [#allocation8], %s34
      %s36 = sshll.u32 [#allocation7], 4
      %s37 = int_to_ptr.vmem [resolvable:$true] %s36
      %42 = dma.hbm_to_vmem [thread:$0]  %s3, 2048, %s37, [#allocation8], 128, 128, 8
    $region17: #{tpu_custom_call.1} parent=1 // pred_fallthru
      _
    // Predicated region
    $region18: #{tpu_custom_call.1} parent=1 // pred_check
      _
    $region19: #{tpu_custom_call.1} parent=1 // pred_check_branch
      %44 = sbr.rel (0) target = $region21
    $region20: #{tpu_custom_call.1} parent=1 // pred_region
      _
    $region21: #{tpu_custom_call.1} parent=1 // pred_fallthru
      _
    // Predicated region
    $region22: #{tpu_custom_call.1} parent=1 // pred_check
      _
    $region23: #{tpu_custom_call.1} parent=1 // pred_check_branch
      %46 = sbr.rel (0) target = $region25
    $region24: #{tpu_custom_call.1} parent=1 // pred_region
      %s48 = ssub.s32 2048, 2048
      %49 = vsyncadd [#allocation8], %s48
      %s50 = sshll.u32 [#allocation9], 4
      %s51 = int_to_ptr.vmem [resolvable:$true] %s50
      %56 = dma.hbm_to_vmem [thread:$0]  %s5, 2048, %s51, [#allocation8], 128, 128, 8
    $region25: #{tpu_custom_call.1} parent=1 // pred_fallthru
      _
    // Predicated region
    $region26: #{tpu_custom_call.1} parent=1 // pred_check
      _
    $region27: #{tpu_custom_call.1} parent=1 // pred_check_branch
      %58 = sbr.rel (0) target = $region29
    $region28: #{tpu_custom_call.1} parent=1 // pred_region
      _
    $region29: #{tpu_custom_call.1} parent=1 // pred_fallthru
      _
    // Predicated region
    $region30: #{tpu_custom_call.1} parent=1 // pred_check
      _
    $region31: #{tpu_custom_call.1} parent=1 // pred_check_branch
      %60 = sbr.rel (0) target = $region33
    $region32: #{tpu_custom_call.1} parent=1 // pred_region
      %61 = dma.done [#allocation5], 256
    $region33: #{tpu_custom_call.1} parent=1 // pred_fallthru
      _
    // Predicated region
    $region34: #{tpu_custom_call.1} parent=1 // pred_check
      _
    $region35: #{tpu_custom_call.1} parent=1 // pred_check_branch
      %63 = sbr.rel (0) target = $region37
    $region36: #{tpu_custom_call.1} parent=1 // pred_region
      %64 = dma.done [#allocation8], 2048
    $region37: #{tpu_custom_call.1} parent=1 // pred_fallthru
      _
    // Predicated region
    $region38: #{tpu_custom_call.1} parent=1 // pred_check
      _
    $region39: #{tpu_custom_call.1} parent=1 // pred_check_branch
      %66 = sbr.rel (0) target = $region41
    $region40: #{tpu_custom_call.1} parent=1 // pred_region
      %67 = dma.done [#allocation8], 2048
    $region41: #{tpu_custom_call.1} parent=1 // pred_fallthru
      _
    %p68 = scmp.eq.s32.totalorder 0, 0
    // Predicated region
    $region42: #{tpu_custom_call.1} parent=1 // pred_check
      %p69 = pneg %p68
    $region43: #{tpu_custom_call.1} parent=1 // pred_check_branch
      %71 = sbr.rel (%p69) target = $region45
    $region44: #{tpu_custom_call.1} parent=1 // pred_region
      %v72 = vld [vmem:[#allocation4] sm:$0xff]
      %v73 = vld [vmem:[#allocation4 + $0x8] sm:$0xff]
      %74 = vadd.xlane.f32.xlu0 %v72
      %v75 = vpop.xlane.xlu0 %74
      %76 = vadd.xlane.f32.xlu0 %v73
      %v77 = vpop.xlane.xlu0 %76
      %v78 = vrcp.pop 128.0
      %v79 = vmul.f32 %v75, %v78
      %v80 = vmul.f32 %v77, %v78
      %v81 = vsub.f32 %v72, %v79
      %v82 = vsub.f32 %v73, %v80
      %v83 = vmul.f32 %v81, %v81
      %v84 = vmul.f32 %v82, %v82
      %85 = vadd.xlane.f32.xlu0 %v83
      %v86 = vpop.xlane.xlu0 %85
      %87 = vadd.xlane.f32.xlu0 %v84
      %v88 = vpop.xlane.xlu0 %87
      %v89 = vmul.f32 %v86, %v78
      %v90 = vmul.f32 %v88, %v78
      %v91 = vadd.f32 %v89, 1e-05
      %v92 = vadd.f32 %v90, 1e-05
      %v93 = vrsqrt.pop %v91
      %v94 = vrsqrt.pop %v92
      %v95 = vmul.f32 %v81, %v93
      %v96 = vmul.f32 %v82, %v94
      %v97 = vld [vmem:[%s1] sm:$0x1]
      %v99 = vlaneseq
      %v100 = vshrl.u32 %v99, 7
      %v101 = vsub.s32 0, %v100
      %v102 = vrot.slane %v97, %v101
      %v104 = vmul.f32 %v95, %v102
      %v105 = vmul.f32 %v96, %v102
      %v106 = vld [vmem:[%s2] sm:$0x1]
      %v108 = vlaneseq
      %v109 = vshrl.u32 %v108, 7
      %v110 = vsub.s32 0, %v109
      %v111 = vrot.slane %v106, %v110
      %v113 = vadd.f32 %v104, %v111
      %v114 = vadd.f32 %v105, %v111
      %115 = vst [vmem:[#allocation2] sm:$0xff] %v113
      %116 = vst [vmem:[#allocation2 + $0x8] sm:$0xff] %v114
      %v117 = vld [vmem:[%s6] sm:$0x1]
      %v119 = vlaneseq
      %v120 = vshrl.u32 %v119, 7
      %v121 = vsub.s32 0, %v120
      %v122 = vrot.slane %v117, %v121
      %v124 = vadd.f32 %v113, %v122
      %v125 = vadd.f32 %v114, %v122
      %126 = vst [vmem:[#allocation3] sm:$0xff] %v124
      %127 = vst [vmem:[#allocation3 + $0x8] sm:$0xff] %v125
    $region45: #{tpu_custom_call.1} parent=1 // pred_fallthru
      _
    %v128 = vld [vmem:[#allocation2] sm:$0xff]
    %v129 = vld [vmem:[#allocation2 + $0x8] sm:$0xff]
    %v130 = vld [vmem:[#allocation7] sm:$0xff]
    %v131 = vld [vmem:[#allocation7 + $0x8] sm:$0xff]
    %v132 = vld [vmem:[#allocation7 + $0x10] sm:$0xff]
    %v133 = vld [vmem:[#allocation7 + $0x18] sm:$0xff]
    %v134 = vld [vmem:[#allocation7 + $0x20] sm:$0xff]
    %v135 = vld [vmem:[#allocation7 + $0x28] sm:$0xff]
    %v136 = vld [vmem:[#allocation7 + $0x30] sm:$0xff]
    %v137 = vld [vmem:[#allocation7 + $0x38] sm:$0xff]
    %v138 = vld [vmem:[#allocation7 + $0x40] sm:$0xff]
    %v139 = vld [vmem:[#allocation7 + $0x48] sm:$0xff]
    %v140 = vld [vmem:[#allocation7 + $0x50] sm:$0xff]
    %v141 = vld [vmem:[#allocation7 + $0x58] sm:$0xff]
    %v142 = vld [vmem:[#allocation7 + $0x60] sm:$0xff]
    %v143 = vld [vmem:[#allocation7 + $0x68] sm:$0xff]
    %v144 = vld [vmem:[#allocation7 + $0x70] sm:$0xff]
    %v145 = vld [vmem:[#allocation7 + $0x78] sm:$0xff]
    %v146 = vld [vmem:[%s4] sm:$0x1]
    %v148 = vlaneseq
    %v149 = vshrl.u32 %v148, 7
    %v150 = vsub.s32 0, %v149
    %v151 = vrot.slane %v146, %v150
    %153 = vmatprep.subr.mxu0 0.0
    %154 = vmatpush1.msra.mxu0 %v130
    %155 = vmatprep.subr.mxu0 0.0
    %156 = vmatpush1.msra.mxu0 %v131
    %157 = vmatprep.subr.mxu0 0.0
    %158 = vmatpush1.msra.mxu0 %v132
    %159 = vmatprep.subr.mxu0 0.0
    %160 = vmatpush1.msra.mxu0 %v133
    %161 = vmatprep.subr.mxu0 0.0
    %162 = vmatpush1.msra.mxu0 %v134
    %163 = vmatprep.subr.mxu0 0.0
    %164 = vmatpush1.msra.mxu0 %v135
    %165 = vmatprep.subr.mxu0 0.0
    %166 = vmatpush1.msra.mxu0 %v136
    %167 = vmatprep.subr.mxu0 0.0
    %168 = vmatpush1.msra.mxu0 %v137
    %169 = vmatprep.subr.mxu0 0.0
    %170 = vmatpush1.msra.mxu0 %v138
    %171 = vmatprep.subr.mxu0 0.0
    %172 = vmatpush1.msra.mxu0 %v139
    %173 = vmatprep.subr.mxu0 0.0
    %174 = vmatpush1.msra.mxu0 %v140
    %175 = vmatprep.subr.mxu0 0.0
    %176 = vmatpush1.msra.mxu0 %v141
    %177 = vmatprep.subr.mxu0 0.0
    %178 = vmatpush1.msra.mxu0 %v142
    %179 = vmatprep.subr.mxu0 0.0
    %180 = vmatpush1.msra.mxu0 %v143
    %181 = vmatprep.subr.mxu0 0.0
    %182 = vmatpush1.msra.mxu0 %v144
    %183 = vmatprep.subr.mxu0 0.0
    %184 = vmatpush1.msra.mxu0 %v145
    %185 = vmatprep.subr.mxu0 0.0
    %186 = vmatpush1.msra.mxu0 0.0
    %187 = vmatprep.subr.mxu0 0.0
    %188 = vmatpush1.msra.mxu0 0.0
    %189 = vmatprep.subr.mxu0 0.0
    %190 = vmatpush1.msra.mxu0 0.0
    %191 = vmatprep.subr.mxu0 0.0
    %192 = vmatpush1.msra.mxu0 0.0
    %193 = vmatprep.subr.mxu0 0.0
    %194 = vmatpush1.msra.mxu0 0.0
    %195 = vmatprep.subr.mxu0 0.0
    %196 = vmatpush1.msra.mxu0 0.0
    %197 = vmatprep.subr.mxu0 0.0
    %198 = vmatpush1.msra.mxu0 0.0
    %199 = vmatprep.subr.mxu0 0.0
    %200 = vmatpush1.msra.mxu0 0.0
    %201 = vmatprep.subr.mxu0 0.0
    %202 = vmatpush1.msra.mxu0 0.0
    %203 = vmatprep.subr.mxu0 0.0
    %204 = vmatpush1.msra.mxu0 0.0
    %205 = vmatprep.subr.mxu0 0.0
    %206 = vmatpush1.msra.mxu0 0.0
    %207 = vmatprep.subr.mxu0 0.0
    %208 = vmatpush1.msra.mxu0 0.0
    %209 = vmatprep.subr.mxu0 0.0
    %210 = vmatpush1.msra.mxu0 0.0
    %211 = vmatprep.subr.mxu0 0.0
    %212 = vmatpush1.msra.mxu0 0.0
    %213 = vmatprep.subr.mxu0 0.0
    %214 = vmatpush1.msra.mxu0 0.0
    %215 = vmatprep.subr.mxu0 0.0
    %216 = vmatpush1.msra.mxu0 0.0
    %217 = vmatprep.mubr.f32.mxu0 0.0
    %218 = vmatmul.mubr.f32.gmra.mrb[0].mxu0 %v128
    %v219 = vpop.f32.mrb[0].mxu0
    %v220 = vadd.f32 %v151, %v219
    %v221 = vpop.f32.mrb[0].mxu0
    %222 = vmatprep.mubr.f32.mxu0 0.0
    %223 = vmatmul.mubr.f32.gmra.mrb[0].mxu0 %v129
    %v224 = vpop.f32.mrb[0].mxu0
    %v225 = vadd.f32 %v151, %v224
    %v226 = vpop.f32.mrb[0].mxu0
    %227 = vdwg.mxu0
    %v228 = vmul.f32 %v220, %v220
    %v229 = vmul.f32 %v225, %v225
    %v230 = vmul.f32 %v220, 0.5
    %v231 = vmul.f32 %v225, 0.5
    %v232 = vmul.f32 %v220, 0.7978846
    %v233 = vmul.f32 %v225, 0.7978846
    %v234 = vmul.f32 %v228, 0.044715
    %v235 = vmul.f32 %v229, 0.044715
    %v236 = vadd.f32 %v234, 1.0
    %v237 = vadd.f32 %v235, 1.0
    %v238 = vmul.f32 %v232, %v236
    %v239 = vmul.f32 %v233, %v237
    %v240 = vtanh.pop %v238
    %v241 = vtanh.pop %v239
    %v242 = vadd.f32 %v240, 1.0
    %v243 = vadd.f32 %v241, 1.0
    %v244 = vmul.f32 %v230, %v242
    %v245 = vmul.f32 %v231, %v243
    %v246 = vld [vmem:[#allocation3] sm:$0xff]
    %v247 = vld [vmem:[#allocation3 + $0x8] sm:$0xff]
    %v248 = vld [vmem:[#allocation9] sm:$0xff]
    %v249 = vld [vmem:[#allocation9 + $0x8] sm:$0xff]
    %v250 = vld [vmem:[#allocation9 + $0x10] sm:$0xff]
    %v251 = vld [vmem:[#allocation9 + $0x18] sm:$0xff]
    %v252 = vld [vmem:[#allocation9 + $0x20] sm:$0xff]
    %v253 = vld [vmem:[#allocation9 + $0x28] sm:$0xff]
    %v254 = vld [vmem:[#allocation9 + $0x30] sm:$0xff]
    %v255 = vld [vmem:[#allocation9 + $0x38] sm:$0xff]
    %v256 = vld [vmem:[#allocation9 + $0x40] sm:$0xff]
    %v257 = vld [vmem:[#allocation9 + $0x48] sm:$0xff]
    %v258 = vld [vmem:[#allocation9 + $0x50] sm:$0xff]
    %v259 = vld [vmem:[#allocation9 + $0x58] sm:$0xff]
    %v260 = vld [vmem:[#allocation9 + $0x60] sm:$0xff]
    %v261 = vld [vmem:[#allocation9 + $0x68] sm:$0xff]
    %v262 = vld [vmem:[#allocation9 + $0x70] sm:$0xff]
    %v263 = vld [vmem:[#allocation9 + $0x78] sm:$0xff]
    %264 = vmatprep.subr.mxu0 0.0
    %265 = vmatpush1.msra.mxu0 %v248
    %266 = vmatprep.subr.mxu0 0.0
    %267 = vmatpush1.msra.mxu0 %v249
    %268 = vmatprep.subr.mxu0 0.0
    %269 = vmatpush1.msra.mxu0 %v250
    %270 = vmatprep.subr.mxu0 0.0
    %271 = vmatpush1.msra.mxu0 %v251
    %272 = vmatprep.subr.mxu0 0.0
    %273 = vmatpush1.msra.mxu0 %v252
    %274 = vmatprep.subr.mxu0 0.0
    %275 = vmatpush1.msra.mxu0 %v253
    %276 = vmatprep.subr.mxu0 0.0
    %277 = vmatpush1.msra.mxu0 %v254
    %278 = vmatprep.subr.mxu0 0.0
    %279 = vmatpush1.msra.mxu0 %v255
    %280 = vmatprep.subr.mxu0 0.0
    %281 = vmatpush1.msra.mxu0 %v256
    %282 = vmatprep.subr.mxu0 0.0
    %283 = vmatpush1.msra.mxu0 %v257
    %284 = vmatprep.subr.mxu0 0.0
    %285 = vmatpush1.msra.mxu0 %v258
    %286 = vmatprep.subr.mxu0 0.0
    %287 = vmatpush1.msra.mxu0 %v259
    %288 = vmatprep.subr.mxu0 0.0
    %289 = vmatpush1.msra.mxu0 %v260
    %290 = vmatprep.subr.mxu0 0.0
    %291 = vmatpush1.msra.mxu0 %v261
    %292 = vmatprep.subr.mxu0 0.0
    %293 = vmatpush1.msra.mxu0 %v262
    %294 = vmatprep.subr.mxu0 0.0
    %295 = vmatpush1.msra.mxu0 %v263
    %296 = vmatprep.subr.mxu0 0.0
    %297 = vmatpush1.msra.mxu0 0.0
    %298 = vmatprep.subr.mxu0 0.0
    %299 = vmatpush1.msra.mxu0 0.0
    %300 = vmatprep.subr.mxu0 0.0
    %301 = vmatpush1.msra.mxu0 0.0
    %302 = vmatprep.subr.mxu0 0.0
    %303 = vmatpush1.msra.mxu0 0.0
    %304 = vmatprep.subr.mxu0 0.0
    %305 = vmatpush1.msra.mxu0 0.0
    %306 = vmatprep.subr.mxu0 0.0
    %307 = vmatpush1.msra.mxu0 0.0
    %308 = vmatprep.subr.mxu0 0.0
    %309 = vmatpush1.msra.mxu0 0.0
    %310 = vmatprep.subr.mxu0 0.0
    %311 = vmatpush1.msra.mxu0 0.0
    %312 = vmatprep.subr.mxu0 0.0
    %313 = vmatpush1.msra.mxu0 0.0
    %314 = vmatprep.subr.mxu0 0.0
    %315 = vmatpush1.msra.mxu0 0.0
    %316 = vmatprep.subr.mxu0 0.0
    %317 = vmatpush1.msra.mxu0 0.0
    %318 = vmatprep.subr.mxu0 0.0
    %319 = vmatpush1.msra.mxu0 0.0
    %320 = vmatprep.subr.mxu0 0.0
    %321 = vmatpush1.msra.mxu0 0.0
    %322 = vmatprep.subr.mxu0 0.0
    %323 = vmatpush1.msra.mxu0 0.0
    %324 = vmatprep.subr.mxu0 0.0
    %325 = vmatpush1.msra.mxu0 0.0
    %326 = vmatprep.subr.mxu0 0.0
    %327 = vmatpush1.msra.mxu0 0.0
    %328 = vmatprep.mubr.f32.mxu0 0.0
    %329 = vmatmul.mubr.f32.gmra.mrb[0].mxu0 %v244
    %v330 = vpop.f32.mrb[0].mxu0
    %v331 = vadd.f32 0.0, %v330
    %v332 = vpop.f32.mrb[0].mxu0
    %333 = vmatprep.mubr.f32.mxu0 0.0
    %334 = vmatmul.mubr.f32.gmra.mrb[0].mxu0 %v245
    %v335 = vpop.f32.mrb[0].mxu0
    %v336 = vadd.f32 0.0, %v335
    %v337 = vpop.f32.mrb[0].mxu0
    %338 = vdwg.mxu0
    %v339 = vadd.f32 %v246, %v331
    %v340 = vadd.f32 %v247, %v336
    %341 = vst [vmem:[#allocation3] sm:$0xff] %v339
    %342 = vst [vmem:[#allocation3 + $0x8] sm:$0xff] %v340
    // Predicated region
    $region46: #{tpu_custom_call.1} parent=1 // pred_check
      %p343 = pneg %p68
    $region47: #{tpu_custom_call.1} parent=1 // pred_check_branch
      %345 = sbr.rel (%p343) target = $region49
    $region48: #{tpu_custom_call.1} parent=1 // pred_region
      %v346 = vld [vmem:[#allocation3] sm:$0xff]
      %v347 = vld [vmem:[#allocation3 + $0x8] sm:$0xff]
      %348 = vst [vmem:[#allocation10] sm:$0xff] %v346
      %349 = vst [vmem:[#allocation10 + $0x8] sm:$0xff] %v347
    $region49: #{tpu_custom_call.1} parent=1 // pred_fallthru
      _
    // Predicated region
    $region50: #{tpu_custom_call.1} parent=1 // pred_check
      _
    $region51: #{tpu_custom_call.1} parent=1 // pred_check_branch
      %351 = sbr.rel (0) target = $region53
    $region52: #{tpu_custom_call.1} parent=1 // pred_region
      %s353 = ssub.s32 256, 256
      %354 = vsyncadd [#allocation6], %s353
      %s355 = sshll.u32 [#allocation10], 4
      %s356 = int_to_ptr.vmem [resolvable:$true] %s355
      %361 = dma.vmem_to_hbm [thread:$0]  %s356, 256, %s7, [#allocation6], 128, 128, 8
    $region53: #{tpu_custom_call.1} parent=1 // pred_fallthru
      _
    // Predicated region
    $region54: #{tpu_custom_call.1} parent=1 // pred_check
      _
    $region55: #{tpu_custom_call.1} parent=1 // pred_check_branch
      %363 = sbr.rel (0) target = $region57
    $region56: #{tpu_custom_call.1} parent=1 // pred_region
      %364 = dma.done [#allocation6], 256
    $region57: #{tpu_custom_call.1} parent=1 // pred_fallthru
      _
    %365 = vsyncpa [#allocation5], 1
    %366 = vsyncpa [#allocation8], 1
    %367 = vsyncpa [#allocation6], 1

// kernel: tpu_custom_call.1
$region0: #{tpu_custom_call.1}
  #allocation0 [shape = 'u32[]', space=smem, size = 0x4, offset = 0x4, fixed_abs, tag = 'smem constant byte address 0x4 - core index']
  #allocation1 [shape = 'u32[144,128]{1,0:T(1,128)}', space=vmem, size = 0x12000, scoped, tag = 'internal scratch']
  #allocation2 [shape = 'f32[16,128]{1,0:T(8,128)}', space=vmem, size = 0x2000, scoped, tag = 'scratch operand']
  #allocation3 [shape = 'f32[16,128]{1,0:T(8,128)}', space=vmem, size = 0x2000, scoped, tag = 'scratch operand']
  %s0 = inlined_call_operand.hbm [shape: f32[16,128], index: 0, kind: input, shape index: {}]
  %s1 = inlined_call_operand.vmem [shape: f32[1,128], index: 1, kind: input, shape index: {}]
  %s2 = inlined_call_operand.vmem [shape: f32[1,128], index: 2, kind: input, shape index: {}]
  %s3 = inlined_call_operand.hbm [shape: f32[128,128], index: 3, kind: input, shape index: {}]
  %s4 = inlined_call_operand.vmem [shape: f32[1,128], index: 4, kind: input, shape index: {}]
  %s5 = inlined_call_operand.hbm [shape: f32[128,128], index: 5, kind: input, shape index: {}]
  %s6 = inlined_call_operand.vmem [shape: f32[1,128], index: 6, kind: input, shape index: {}]
  %s7 = inlined_call_operand.hbm [shape: f32[16,128], index: 7, kind: output, shape index: {}]
  %s8 = sld [smem:[#allocation0]]
  $region58: #{tpu_custom_call.1} parent=0
    _
  %s10 = ssub.s32 1, %s8
  %s11 = scalar_select 0, %s10, %s8
  $region1: #{tpu_custom_call.1} parent=0
    #allocation4 [shape = 'u8[8192]{0}', space=vmem, size = 0x2000, scoped, tag = 'input window, operand 0, single buffered']
    #allocation5 [shape = 's32[1]{0}', space=sflag, size = 0x4, scoped, tag = 'scoped memory for tpu_custom_call.1']
    #allocation6 [shape = 's32[1]{0}', space=sflag, size = 0x4, scoped, tag = 'scoped memory for tpu_custom_call.1']
    #allocation7 [shape = 'u8[65536]{0}', space=vmem, size = 0x10000, scoped, tag = 'input window, operand 3, single buffered']
    #allocation8 [shape = 's32[1]{0}', space=sflag, size = 0x4, scoped, tag = 'scoped memory for tpu_custom_call.1']
    #allocation9 [shape = 'u8[65536]{0}', space=vmem, size = 0x10000, scoped, tag = 'input window, operand 5, single buffered']
    #allocation10 [shape = 'u8[8192]{0}', space=vmem, size = 0x2000, scoped, tag = 'output window, operand 0, single buffered']
    %12 = vsyncpa [#allocation5], 0
    %13 = vsyncpa [#allocation8], 0
    %14 = vsyncpa [#allocation6], 0
    // Predicated region
    $region2: #{tpu_custom_call.1} parent=1 // pred_check
      _
    $region3: #{tpu_custom_call.1} parent=1 // pred_check_branch
      %16 = sbr.rel (0) target = $region5
    $region4: #{tpu_custom_call.1} parent=1 // pred_region
      %s18 = ssub.s32 256, 256
      %19 = vsyncadd [#allocation5], %s18
      %s20 = sshll.u32 [#allocation4], 4
      %s21 = int_to_ptr.vmem [resolvable:$true] %s20
      %26 = dma.hbm_to_vmem [thread:$0]  %s0, 256, %s21, [#allocation5], 128, 128, 8
    $region5: #{tpu_custom_call.1} parent=1 // pred_fallthru
      _
    // Predicated region
    $region6: #{tpu_custom_call.1} parent=1 // pred_check
      _
    $region7: #{tpu_custom_call.1} parent=1 // pred_check_branch
      %28 = sbr.rel (0) target = $region9
    $region8: #{tpu_custom_call.1} parent=1 // pred_region
      _
    $region9: #{tpu_custom_call.1} parent=1 // pred_fallthru
      _
    // Predicated region
    $region10: #{tpu_custom_call.1} parent=1 // pred_check
      _
    $region11: #{tpu_custom_call.1} parent=1 // pred_check_branch
      %30 = sbr.rel (0) target = $region13
    $region12: #{tpu_custom_call.1} parent=1 // pred_region
      _
    $region13: #{tpu_custom_call.1} parent=1 // pred_fallthru
      _
    // Predicated region
    $region14: #{tpu_custom_call.1} parent=1 // pred_check
      _
    $region15: #{tpu_custom_call.1} parent=1 // pred_check_branch
      %32 = sbr.rel (0) target = $region17
    $region16: #{tpu_custom_call.1} parent=1 // pred_region
      %s34 = ssub.s32 2048, 2048
      %35 = vsyncadd [#allocation8], %s34
      %s36 = sshll.u32 [#allocation7], 4
      %s37 = int_to_ptr.vmem [resolvable:$true] %s36
      %42 = dma.hbm_to_vmem [thread:$0]  %s3, 2048, %s37, [#allocation8], 128, 128, 8
    $region17: #{tpu_custom_call.1} parent=1 // pred_fallthru
      _
    // Predicated region
    $region18: #{tpu_custom_call.1} parent=1 // pred_check
      _
    $region19: #{tpu_custom_call.1} parent=1 // pred_check_branch
      %44 = sbr.rel (0) target = $region21
    $region20: #{tpu_custom_call.1} parent=1 // pred_region
      _
    $region21: #{tpu_custom_call.1} parent=1 // pred_fallthru
      _
    // Predicated region
    $region22: #{tpu_custom_call.1} parent=1 // pred_check
      _
    $region23: #{tpu_custom_call.1} parent=1 // pred_check_branch
      %46 = sbr.rel (0) target = $region25
    $region24: #{tpu_custom_call.1} parent=1 // pred_region
      %s48 = ssub.s32 2048, 2048
      %49 = vsyncadd [#allocation8], %s48
      %s50 = sshll.u32 [#allocation9], 4
      %s51 = int_to_ptr.vmem [resolvable:$true] %s50
      %56 = dma.hbm_to_vmem [thread:$0]  %s5, 2048, %s51, [#allocation8], 128, 128, 8
    $region25: #{tpu_custom_call.1} parent=1 // pred_fallthru
      _
    // Predicated region
    $region26: #{tpu_custom_call.1} parent=1 // pred_check
      _
    $region27: #{tpu_custom_call.1} parent=1 // pred_check_branch
      %58 = sbr.rel (0) target = $region29
    $region28: #{tpu_custom_call.1} parent=1 // pred_region
      _
    $region29: #{tpu_custom_call.1} parent=1 // pred_fallthru
      _
    // Predicated region
    $region30: #{tpu_custom_call.1} parent=1 // pred_check
      _
    $region31: #{tpu_custom_call.1} parent=1 // pred_check_branch
      %60 = sbr.rel (0) target = $region33
    $region32: #{tpu_custom_call.1} parent=1 // pred_region
      %61 = dma.done [#allocation5], 256
    $region33: #{tpu_custom_call.1} parent=1 // pred_fallthru
      _
    // Predicated region
    $region34: #{tpu_custom_call.1} parent=1 // pred_check
      _
    $region35: #{tpu_custom_call.1} parent=1 // pred_check_branch
      %63 = sbr.rel (0) target = $region37
    $region36: #{tpu_custom_call.1} parent=1 // pred_region
      %64 = dma.done [#allocation8], 2048
    $region37: #{tpu_custom_call.1} parent=1 // pred_fallthru
      _
    // Predicated region
    $region38: #{tpu_custom_call.1} parent=1 // pred_check
      _
    $region39: #{tpu_custom_call.1} parent=1 // pred_check_branch
      %66 = sbr.rel (0) target = $region41
    $region40: #{tpu_custom_call.1} parent=1 // pred_region
      %67 = dma.done [#allocation8], 2048
    $region41: #{tpu_custom_call.1} parent=1 // pred_fallthru
      _
    %p68 = scmp.eq.s32.totalorder 0, 0
    // Predicated region
    $region42: #{tpu_custom_call.1} parent=1 // pred_check
      %p69 = pneg %p68
    $region43: #{tpu_custom_call.1} parent=1 // pred_check_branch
      %71 = sbr.rel (%p69) target = $region45
    $region44: #{tpu_custom_call.1} parent=1 // pred_region
      %v72 = vld [vmem:[#allocation4] sm:$0xff]
      %v73 = vld [vmem:[#allocation4 + $0x8] sm:$0xff]
      %74 = vadd.xlane.f32.xlu0 %v72
      %v75 = vpop.xlane.xlu0 %74
      %76 = vadd.xlane.f32.xlu0 %v73
      %v77 = vpop.xlane.xlu0 %76
      %v78 = vrcp.pop 128.0
      %v79 = vmul.f32 %v75, %v78
      %v80 = vmul.f32 %v77, %v78
      %v81 = vsub.f32 %v72, %v79
      %v82 = vsub.f32 %v73, %v80
      %v83 = vmul.f32 %v81, %v81
      %v84 = vmul.f32 %v82, %v82
      %85 = vadd.xlane.f32.xlu0 %v83
      %v86 = vpop.xlane.xlu0 %85
      %87 = vadd.xlane.f32.xlu0 %v84
      %v88 = vpop.xlane.xlu0 %87
      %v89 = vmul.f32 %v86, %v78
      %v90 = vmul.f32 %v88, %v78
      %v91 = vadd.f32 %v89, 1e-05
      %v92 = vadd.f32 %v90, 1e-05
      %v93 = vrsqrt.pop %v91
      %v94 = vrsqrt.pop %v92
      %v95 = vmul.f32 %v81, %v93
      %v96 = vmul.f32 %v82, %v94
      %v97 = vld [vmem:[%s1] sm:$0x1]
      %v99 = vlaneseq
      %v100 = vshrl.u32 %v99, 7
      %v101 = vsub.s32 0, %v100
      %v102 = vrot.slane %v97, %v101
      %v104 = vmul.f32 %v95, %v102
      %v105 = vmul.f32 %v96, %v102
      %v106 = vld [vmem:[%s2] sm:$0x1]
      %v108 = vlaneseq
      %v109 = vshrl.u32 %v108, 7
      %v110 = vsub.s32 0, %v109
      %v111 = vrot.slane %v106, %v110
      %v113 = vadd.f32 %v104, %v111
      %v114 = vadd.f32 %v105, %v111
      %115 = vst [vmem:[#allocation2] sm:$0xff] %v113
      %116 = vst [vmem:[#allocation2 + $0x8] sm:$0xff] %v114
      %v117 = vld [vmem:[%s6] sm:$0x1]
      %v119 = vlaneseq
      %v120 = vshrl.u32 %v119, 7
      %v121 = vsub.s32 0, %v120
      %v122 = vrot.slane %v117, %v121
      %v124 = vadd.f32 %v113, %v122
      %v125 = vadd.f32 %v114, %v122
      %126 = vst [vmem:[#allocation3] sm:$0xff] %v124
      %127 = vst [vmem:[#allocation3 + $0x8] sm:$0xff] %v125
    $region45: #{tpu_custom_call.1} parent=1 // pred_fallthru
      _
    %v128 = vld [vmem:[#allocation2] sm:$0xff]
    %v129 = vld [vmem:[#allocation2 + $0x8] sm:$0xff]
    %v130 = vld [vmem:[#allocation7] sm:$0xff]
    %v131 = vld [vmem:[#allocation7 + $0x8] sm:$0xff]
    %v132 = vld [vmem:[#allocation7 + $0x10] sm:$0xff]
    %v133 = vld [vmem:[#allocation7 + $0x18] sm:$0xff]
    %v134 = vld [vmem:[#allocation7 + $0x20] sm:$0xff]
    %v135 = vld [vmem:[#allocation7 + $0x28] sm:$0xff]
    %v136 = vld [vmem:[#allocation7 + $0x30] sm:$0xff]
    %v137 = vld [vmem:[#allocation7 + $0x38] sm:$0xff]
    %v138 = vld [vmem:[#allocation7 + $0x40] sm:$0xff]
    %v139 = vld [vmem:[#allocation7 + $0x48] sm:$0xff]
    %v140 = vld [vmem:[#allocation7 + $0x50] sm:$0xff]
    %v141 = vld [vmem:[#allocation7 + $0x58] sm:$0xff]
    %v142 = vld [vmem:[#allocation7 + $0x60] sm:$0xff]
    %v143 = vld [vmem:[#allocation7 + $0x68] sm:$0xff]
    %v144 = vld [vmem:[#allocation7 + $0x70] sm:$0xff]
    %v145 = vld [vmem:[#allocation7 + $0x78] sm:$0xff]
    %v146 = vld [vmem:[%s4] sm:$0x1]
    %v148 = vlaneseq
    %v149 = vshrl.u32 %v148, 7
    %v150 = vsub.s32 0, %v149
    %v151 = vrot.slane %v146, %v150
    %153 = vmatprep.subr.mxu0 0.0
    %154 = vmatpush1.msra.mxu0 %v130
    %155 = vmatprep.subr.mxu0 0.0
    %156 = vmatpush1.msra.mxu0 %v131
    %157 = vmatprep.subr.mxu0 0.0
    %158 = vmatpush1.msra.mxu0 %v132
    %159 = vmatprep.subr.mxu0 0.0
    %160 = vmatpush1.msra.mxu0 %v133
    %161 = vmatprep.subr.mxu0 0.0
    %162 = vmatpush1.msra.mxu0 %v134
    %163 = vmatprep.subr.mxu0 0.0
    %164 = vmatpush1.msra.mxu0 %v135
    %165 = vmatprep.subr.mxu0 0.0
    %166 = vmatpush1.msra.mxu0 %v136
    %167 = vmatprep.subr.mxu0 0.0
    %168 = vmatpush1.msra.mxu0 %v137
    %169 = vmatprep.subr.mxu0 0.0
    %170 = vmatpush1.msra.mxu0 %v138
    %171 = vmatprep.subr.mxu0 0.0
    %172 = vmatpush1.msra.mxu0 %v139
    %173 = vmatprep.subr.mxu0 0.0
    %174 = vmatpush1.msra.mxu0 %v140
    %175 = vmatprep.subr.mxu0 0.0
    %176 = vmatpush1.msra.mxu0 %v141
    %177 = vmatprep.subr.mxu0 0.0
    %178 = vmatpush1.msra.mxu0 %v142
    %179 = vmatprep.subr.mxu0 0.0
    %180 = vmatpush1.msra.mxu0 %v143
    %181 = vmatprep.subr.mxu0 0.0
    %182 = vmatpush1.msra.mxu0 %v144
    %183 = vmatprep.subr.mxu0 0.0
    %184 = vmatpush1.msra.mxu0 %v145
    %185 = vmatprep.subr.mxu0 0.0
    %186 = vmatpush1.msra.mxu0 0.0
    %187 = vmatprep.subr.mxu0 0.0
    %188 = vmatpush1.msra.mxu0 0.0
    %189 = vmatprep.subr.mxu0 0.0
    %190 = vmatpush1.msra.mxu0 0.0
    %191 = vmatprep.subr.mxu0 0.0
    %192 = vmatpush1.msra.mxu0 0.0
    %193 = vmatprep.subr.mxu0 0.0
    %194 = vmatpush1.msra.mxu0 0.0
    %195 = vmatprep.subr.mxu0 0.0
    %196 = vmatpush1.msra.mxu0 0.0
    %197 = vmatprep.subr.mxu0 0.0
    %198 = vmatpush1.msra.mxu0 0.0
    %199 = vmatprep.subr.mxu0 0.0
    %200 = vmatpush1.msra.mxu0 0.0
    %201 = vmatprep.subr.mxu0 0.0
    %202 = vmatpush1.msra.mxu0 0.0
    %203 = vmatprep.subr.mxu0 0.0
    %204 = vmatpush1.msra.mxu0 0.0
    %205 = vmatprep.subr.mxu0 0.0
    %206 = vmatpush1.msra.mxu0 0.0
    %207 = vmatprep.subr.mxu0 0.0
    %208 = vmatpush1.msra.mxu0 0.0
    %209 = vmatprep.subr.mxu0 0.0
    %210 = vmatpush1.msra.mxu0 0.0
    %211 = vmatprep.subr.mxu0 0.0
    %212 = vmatpush1.msra.mxu0 0.0
    %213 = vmatprep.subr.mxu0 0.0
    %214 = vmatpush1.msra.mxu0 0.0
    %215 = vmatprep.subr.mxu0 0.0
    %216 = vmatpush1.msra.mxu0 0.0
    %217 = vmatprep.mubr.f32.mxu0 0.0
    %218 = vmatmul.mubr.f32.gmra.mrb[0].mxu0 %v128
    %v219 = vpop.f32.mrb[0].mxu0
    %v220 = vadd.f32 %v151, %v219
    %v221 = vpop.f32.mrb[0].mxu0
    %222 = vmatprep.mubr.f32.mxu0 0.0
    %223 = vmatmul.mubr.f32.gmra.mrb[0].mxu0 %v129
    %v224 = vpop.f32.mrb[0].mxu0
    %v225 = vadd.f32 %v151, %v224
    %v226 = vpop.f32.mrb[0].mxu0
    %227 = vdwg.mxu0
    %v228 = vmul.f32 %v220, %v220
    %v229 = vmul.f32 %v225, %v225
    %v230 = vmul.f32 %v220, 0.5
    %v231 = vmul.f32 %v225, 0.5
    %v232 = vmul.f32 %v220, 0.7978846
    %v233 = vmul.f32 %v225, 0.7978846
    %v234 = vmul.f32 %v228, 0.044715
    %v235 = vmul.f32 %v229, 0.044715
    %v236 = vadd.f32 %v234, 1.0
    %v237 = vadd.f32 %v235, 1.0
    %v238 = vmul.f32 %v232, %v236
    %v239 = vmul.f32 %v233, %v237
    %v240 = vtanh.pop %v238
    %v241 = vtanh.pop %v239
    %v242 = vadd.f32 %v240, 1.0
    %v243 = vadd.f32 %v241, 1.0
    %v244 = vmul.f32 %v230, %v242
    %v245 = vmul.f32 %v231, %v243
    %v246 = vld [vmem:[#allocation3] sm:$0xff]
    %v247 = vld [vmem:[#allocation3 + $0x8] sm:$0xff]
    %v248 = vld [vmem:[#allocation9] sm:$0xff]
    %v249 = vld [vmem:[#allocation9 + $0x8] sm:$0xff]
    %v250 = vld [vmem:[#allocation9 + $0x10] sm:$0xff]
    %v251 = vld [vmem:[#allocation9 + $0x18] sm:$0xff]
    %v252 = vld [vmem:[#allocation9 + $0x20] sm:$0xff]
    %v253 = vld [vmem:[#allocation9 + $0x28] sm:$0xff]
    %v254 = vld [vmem:[#allocation9 + $0x30] sm:$0xff]
    %v255 = vld [vmem:[#allocation9 + $0x38] sm:$0xff]
    %v256 = vld [vmem:[#allocation9 + $0x40] sm:$0xff]
    %v257 = vld [vmem:[#allocation9 + $0x48] sm:$0xff]
    %v258 = vld [vmem:[#allocation9 + $0x50] sm:$0xff]
    %v259 = vld [vmem:[#allocation9 + $0x58] sm:$0xff]
    %v260 = vld [vmem:[#allocation9 + $0x60] sm:$0xff]
    %v261 = vld [vmem:[#allocation9 + $0x68] sm:$0xff]
    %v262 = vld [vmem:[#allocation9 + $0x70] sm:$0xff]
    %v263 = vld [vmem:[#allocation9 + $0x78] sm:$0xff]
    %264 = vmatprep.subr.mxu0 0.0
    %265 = vmatpush1.msra.mxu0 %v248
    %266 = vmatprep.subr.mxu0 0.0
    %267 = vmatpush1.msra.mxu0 %v249
    %268 = vmatprep.subr.mxu0 0.0
    %269 = vmatpush1.msra.mxu0 %v250
    %270 = vmatprep.subr.mxu0 0.0
    %271 = vmatpush1.msra.mxu0 %v251
    %272 = vmatprep.subr.mxu0 0.0
    %273 = vmatpush1.msra.mxu0 %v252
    %274 = vmatprep.subr.mxu0 0.0
    %275 = vmatpush1.msra.mxu0 %v253
    %276 = vmatprep.subr.mxu0 0.0
    %277 = vmatpush1.msra.mxu0 %v254
    %278 = vmatprep.subr.mxu0 0.0
    %279 = vmatpush1.msra.mxu0 %v255
    %280 = vmatprep.subr.mxu0 0.0
    %281 = vmatpush1.msra.mxu0 %v256
    %282 = vmatprep.subr.mxu0 0.0
    %283 = vmatpush1.msra.mxu0 %v257
    %284 = vmatprep.subr.mxu0 0.0
    %285 = vmatpush1.msra.mxu0 %v258
    %286 = vmatprep.subr.mxu0 0.0
    %287 = vmatpush1.msra.mxu0 %v259
    %288 = vmatprep.subr.mxu0 0.0
    %289 = vmatpush1.msra.mxu0 %v260
    %290 = vmatprep.subr.mxu0 0.0
    %291 = vmatpush1.msra.mxu0 %v261
    %292 = vmatprep.subr.mxu0 0.0
    %293 = vmatpush1.msra.mxu0 %v262
    %294 = vmatprep.subr.mxu0 0.0
    %295 = vmatpush1.msra.mxu0 %v263
    %296 = vmatprep.subr.mxu0 0.0
    %297 = vmatpush1.msra.mxu0 0.0
    %298 = vmatprep.subr.mxu0 0.0
    %299 = vmatpush1.msra.mxu0 0.0
    %300 = vmatprep.subr.mxu0 0.0
    %301 = vmatpush1.msra.mxu0 0.0
    %302 = vmatprep.subr.mxu0 0.0
    %303 = vmatpush1.msra.mxu0 0.0
    %304 = vmatprep.subr.mxu0 0.0
    %305 = vmatpush1.msra.mxu0 0.0
    %306 = vmatprep.subr.mxu0 0.0
    %307 = vmatpush1.msra.mxu0 0.0
    %308 = vmatprep.subr.mxu0 0.0
    %309 = vmatpush1.msra.mxu0 0.0
    %310 = vmatprep.subr.mxu0 0.0
    %311 = vmatpush1.msra.mxu0 0.0
    %312 = vmatprep.subr.mxu0 0.0
    %313 = vmatpush1.msra.mxu0 0.0
    %314 = vmatprep.subr.mxu0 0.0
    %315 = vmatpush1.msra.mxu0 0.0
    %316 = vmatprep.subr.mxu0 0.0
    %317 = vmatpush1.msra.mxu0 0.0
    %318 = vmatprep.subr.mxu0 0.0
    %319 = vmatpush1.msra.mxu0 0.0
    %320 = vmatprep.subr.mxu0 0.0
    %321 = vmatpush1.msra.mxu0 0.0
    %322 = vmatprep.subr.mxu0 0.0
    %323 = vmatpush1.msra.mxu0 0.0
    %324 = vmatprep.subr.mxu0 0.0
    %325 = vmatpush1.msra.mxu0 0.0
    %326 = vmatprep.subr.mxu0 0.0
    %327 = vmatpush1.msra.mxu0 0.0
    %328 = vmatprep.mubr.f32.mxu0 0.0
    %329 = vmatmul.mubr.f32.gmra.mrb[0].mxu0 %v244
    %v330 = vpop.f32.mrb[0].mxu0
    %v331 = vadd.f32 0.0, %v330
    %v332 = vpop.f32.mrb[0].mxu0
    %333 = vmatprep.mubr.f32.mxu0 0.0
    %334 = vmatmul.mubr.f32.gmra.mrb[0].mxu0 %v245
    %v335 = vpop.f32.mrb[0].mxu0
    %v336 = vadd.f32 0.0, %v335
    %v337 = vpop.f32.mrb[0].mxu0
    %338 = vdwg.mxu0
    %v339 = vadd.f32 %v246, %v331
    %v340 = vadd.f32 %v247, %v336
    %341 = vst [vmem:[#allocation3] sm:$0xff] %v339
    %342 = vst [vmem:[#allocation3 + $0x8] sm:$0xff] %v340
    // Predicated region
    $region46: #{tpu_custom_call.1} parent=1 // pred_check
      %p343 = pneg %p68
    $region47: #{tpu_custom_call.1} parent=1 // pred_check_branch
      %345 = sbr.rel (%p343) target = $region49
    $region48: #{tpu_custom_call.1} parent=1 // pred_region
      %v346 = vld [vmem:[#allocation3] sm:$0xff]
      %v347 = vld [vmem:[#allocation3 + $0x8] sm:$0xff]
      %348 = vst [vmem:[#allocation10] sm:$0xff] %v346
      %349 = vst [vmem:[#allocation10 + $0x8] sm:$0xff] %v347
    $region49: #{tpu_custom_call.1} parent=1 // pred_fallthru
      _
    // Predicated region
    $region50: #{tpu_custom_call.1} parent=1 // pred_check
      _
    $region51: #{tpu_custom_call.1} parent=1 // pred_check_branch
      %351 = sbr.rel (0) target = $region53
    $region52: #{tpu_custom_call.1} parent=1 // pred_region
      %s353 = ssub.s32 256, 256
      %354 = vsyncadd [#allocation6], %s353
      %s355 = sshll.u32 [#allocation10], 4
      %s356 = int_to_ptr.vmem [resolvable:$true] %s355
      %361 = dma.vmem_to_hbm [thread:$0]  %s356, 256, %s7, [#allocation6], 128, 128, 8
    $region53: #{tpu_custom_call.1} parent=1 // pred_fallthru
      _
    // Predicated region
    $region54: #{tpu_custom_call.1} parent=1 // pred_check
      _
    $region55: #{tpu_custom_call.1} parent=1 // pred_check_branch
      %363 = sbr.rel (0) target = $region57
    $region56: #{tpu_custom_call.1} parent=1 // pred_region
      %364 = dma.done [#allocation6], 256
    $region57: #{tpu_custom_call.1} parent=1 // pred_fallthru
      _
    %365 = vsyncpa [#allocation5], 1
    %366 = vsyncpa [#allocation8], 1
    %367 = vsyncpa [#allocation6], 1

</llo_original>
